<compile_context>
chip_gen: v7x
topology: tpu7x:2x2x1
jax: 0.10.0
libtpu: 0.0.40
codegen_flags: <defaults>
</compile_context>

<pallas_src>
import functools

import jax
import jax.numpy as jnp
from jax.experimental import pallas as pl
from jax.experimental.pallas import tpu as pltpu

LANE = 128        # lane-dense output width (action_dim padded to this)
H1_PAD = 512      # l1 width 400 -> 512
H2_PAD = 384      # l2 width 300 -> 384
MAX_TILE_B = 1024 # per-step footprint ~10 MB at 1024: safe on v5e/v6e (128 MiB)
                  # and v7x (64 MiB physical / 32 MiB default scoped VMEM)


def _round_up(x, m):
    return (x + m - 1) // m * m


def _cdiv(a, b):
    return (a + b - 1) // b


def actor_kernel(x_ref, w1_ref, b1_ref, w2_ref, b2_ref, w3_ref, b3_ref,
                 pma_ref, ma_ref, out_ref, *, action_dim):
    """One batch tile of the BCQ Actor forward.

    x_ref:   [tile_b, d_pad] f32, concat ordered [action | state] (+ zero pad)
    w*_ref:  bf16 weights, VMEM-resident (constant index_map)
    pma_ref: [1, LANE] f32 = phi * max_action, zero beyond action_dim
    ma_ref:  [1, action_dim] f32 = max_action (unpadded)
    out_ref: [tile_b, LANE] f32; lanes >= action_dim are written as 0
    """
    x = x_ref[...]                                               # f32

    # Fused layer 1: single matmul over K = state_dim + action_dim (bf16 MXU, f32 acc).
    h = jnp.dot(x.astype(jnp.bfloat16), w1_ref[...],
                preferred_element_type=jnp.float32) + b1_ref[...]
    h = jnp.maximum(h, 0.0)
    h = jnp.dot(h.astype(jnp.bfloat16), w2_ref[...],
                preferred_element_type=jnp.float32) + b2_ref[...]
    h = jnp.maximum(h, 0.0)
    h3 = jnp.dot(h.astype(jnp.bfloat16), w3_ref[...],
                 preferred_element_type=jnp.float32) + b3_ref[...]

    # a = phi * max_action * tanh(h3); pma is zero beyond action_dim so padded
    # lanes of `a` are exactly 0.
    a = pma_ref[...] * jnp.tanh(h3)                              # [tile_b, LANE]
    out_ref[...] = a.astype(out_ref.dtype)                       # lane-dense store

    # The action lives in lanes [0, action_dim) of x; do the add + clip only
    # on those lanes and overwrite them in the output block.
    ma = ma_ref[...]                                             # [1, action_dim]
    res = jnp.clip(a[:, :action_dim] + x[:, :action_dim], -ma, ma)
    out_ref[:, :action_dim] = res.astype(out_ref.dtype)


def prepare_actor_params(params, max_action, state_dim, action_dim, phi=0.05):
    """One-time layout prep (hoisted out of the per-call path).

    params store weights as [in, out] (transposed vs. torch's [out, in]); w1 is
    for the concatenated [state, action] input.  We reorder w1 rows to the
    kernel's [action | state] order, pad to MXU/lane-friendly sizes and cast
    weights to bf16.  phi is folded into pma so it never bakes into the kernel.
    """
    d = state_dim + action_dim
    d_pad = _round_up(d, 8)

    def pad2(w, rows, cols):
        return jnp.pad(w, ((0, rows - w.shape[0]), (0, cols - w.shape[1])))

    def pad1(b, cols):
        return jnp.pad(b, (0, cols - b.shape[0])).reshape(1, -1)

    w1 = params["w1"]                                   # [state_dim+action_dim, 400]
    w1_reord = jnp.concatenate([w1[state_dim:], w1[:state_dim]], axis=0)

    return dict(
        w1=pad2(w1_reord, d_pad, H1_PAD).astype(jnp.bfloat16),
        b1=pad1(params["b1"], H1_PAD),
        w2=pad2(params["w2"], H1_PAD, H2_PAD).astype(jnp.bfloat16),
        b2=pad1(params["b2"], H2_PAD),
        w3=pad2(params["w3"], H2_PAD, LANE).astype(jnp.bfloat16),
        b3=pad1(params["b3"], LANE),
        pma=pad1(phi * max_action.astype(jnp.float32), LANE),
        ma=max_action.astype(jnp.float32).reshape(1, -1),
        state_dim=state_dim, action_dim=action_dim, d_pad=d_pad,
    )


def _pick_batch_tile(b):
    """Batch tile <= MAX_TILE_B; split into >= 2 (even) steps for large B so the
    'parallel' batch axis can use both v7x TensorCores, with bounded padding."""
    b8 = _round_up(max(b, 1), 8)
    if b8 <= MAX_TILE_B:
        tile = b8
        if tile >= MAX_TILE_B:            # exactly one max-size tile -> split in two
            tile = _round_up(_cdiv(b8, 2), 8)
    else:
        n = _cdiv(b8, MAX_TILE_B)
        if n % 2:
            n += 1                        # even step count (v7x megacore)
        tile = _round_up(_cdiv(b8, n), 8)
    b_pad = _round_up(b8, tile)
    return tile, b_pad


def actor_forward(state, action, prepared):
    """state: [B, state_dim] f32, action: [B, action_dim] f32 -> [B, action_dim] f32."""
    b = state.shape[0]
    sd, ad, d_pad = prepared["state_dim"], prepared["action_dim"], prepared["d_pad"]
    assert state.shape[1] == sd and action.shape[1] == ad

    tile_b, b_pad = _pick_batch_tile(b)

    # Concat ordered [action | state] so the action sits in lanes 0..ad-1;
    # pad K to d_pad (mult of 8) and batch to b_pad.  ~4*(sd+ad) B/row input DMA.
    x = jnp.concatenate([action, state], axis=1).astype(jnp.float32)
    x = jnp.pad(x, ((0, b_pad - b), (0, d_pad - (sd + ad))))

    row = lambda i: (i, 0)    # batch-tiled operands
    rep = lambda i: (0, 0)    # VMEM-resident weights / biases
    # (Optional further VMEM saving on v7x: pipeline_mode=pl.Buffered(1) on the
    #  constant-index weight specs; omitted since the footprint already fits.)

    flops = 2 * b_pad * (d_pad * H1_PAD + H1_PAD * H2_PAD + H2_PAD * LANE)
    bytes_accessed = (
        b_pad * d_pad * 4 + b_pad * LANE * 4
        + (prepared["w1"].size + prepared["w2"].size + prepared["w3"].size) * 2
        + (prepared["b1"].size + prepared["b2"].size + prepared["b3"].size
           + prepared["pma"].size + prepared["ma"].size) * 4)

    out_padded = pl.pallas_call(
        functools.partial(actor_kernel, action_dim=ad),
        out_shape=jax.ShapeDtypeStruct((b_pad, LANE), jnp.float32),
        grid=(b_pad // tile_b,),
        in_specs=[
            pl.BlockSpec((tile_b, d_pad), row),          # x = [action | state]
            pl.BlockSpec((d_pad, H1_PAD), rep),          # w1 (fused concat weight)
            pl.BlockSpec((1, H1_PAD), rep),              # b1
            pl.BlockSpec((H1_PAD, H2_PAD), rep),         # w2
            pl.BlockSpec((1, H2_PAD), rep),              # b2
            pl.BlockSpec((H2_PAD, LANE), rep),           # w3
            pl.BlockSpec((1, LANE), rep),                # b3
            pl.BlockSpec((1, LANE), rep),                # pma = phi * max_action
            pl.BlockSpec((1, ad), rep),                  # max_action (unpadded)
        ],
        out_specs=pl.BlockSpec((tile_b, LANE), row),
        compiler_params=pltpu.CompilerParams(
            dimension_semantics=("parallel",)),
        cost_estimate=pl.CostEstimate(
            flops=flops,
            transcendentals=b_pad * LANE,
            bytes_accessed=bytes_accessed),
    )(x, prepared["w1"], prepared["b1"], prepared["w2"], prepared["b2"],
      prepared["w3"], prepared["b3"], prepared["pma"], prepared["ma"])

    return out_padded[:b, :ad]


def init_params(key, state_dim, action_dim):
    """Deterministic synthetic init (PyTorch-Linear-like uniform bounds)."""
    def linear(key, fan_in, fan_out):
        kw, kb = jax.random.split(key)
        bound = 1.0 / jnp.sqrt(fan_in)
        w = jax.random.uniform(kw, (fan_in, fan_out), jnp.float32, -bound, bound)
        b = jax.random.uniform(kb, (fan_out,), jnp.float32, -bound, bound)
        return w, b

    k1, k2, k3 = jax.random.split(key, 3)
    w1, b1 = linear(k1, state_dim + action_dim, 400)
    w2, b2 = linear(k2, 400, 300)
    w3, b3 = linear(k3, 300, action_dim)
    return dict(w1=w1, b1=b1, w2=w2, b2=b2, w3=w3, b3=b3)


def actor_reference(state, action, params, max_action, phi=0.05):
    x = jnp.concatenate([state, action], axis=1)
    h = jnp.maximum(x @ params["w1"] + params["b1"], 0.0)
    h = jnp.maximum(h @ params["w2"] + params["b2"], 0.0)
    a = phi * max_action * jnp.tanh(h @ params["w3"] + params["b3"])
    return jnp.clip(a + action, -max_action, max_action)


if __name__ == "__main__":
    key = jax.random.PRNGKey(0)
    kp, ks, ka, ks2, ka2 = jax.random.split(key, 5)

    state_dim, action_dim, phi = 17, 6, 0.05
    max_action = jnp.full((action_dim,), 1.0, jnp.float32)
    params = init_params(kp, state_dim, action_dim)

    # One-time weight prep hoisted out of the per-call path.
    prepared = prepare_actor_params(params, max_action, state_dim, action_dim, phi)
    fwd = jax.jit(functools.partial(actor_forward, prepared=prepared))

    # Small-batch check (typical single-step generation shape).
    batch = 2
    state = jax.random.normal(ks, (batch, state_dim), jnp.float32)
    action = jax.random.normal(ka, (batch, action_dim), jnp.float32)
    out = jax.block_until_ready(fwd(state, action))
    ref = actor_reference(state, action, params, max_action, phi)
    assert out.shape == (batch, action_dim)
    # bf16 matmul operands (f32 accumulation) -> relaxed tolerance (intentional trade).
    assert jnp.allclose(out, ref, atol=1e-2, rtol=1e-2), (out, ref)

    # Larger batch exercising a multi-step "parallel" grid plus batch padding.
    batch2 = 1537
    state2 = jax.random.normal(ks2, (batch2, state_dim), jnp.float32)
    action2 = jax.random.normal(ka2, (batch2, action_dim), jnp.float32)
    out2 = jax.block_until_ready(fwd(state2, action2))
    ref2 = actor_reference(state2, action2, params, max_action, phi)
    assert out2.shape == (batch2, action_dim)
    assert jnp.allclose(out2, ref2, atol=1e-2, rtol=1e-2)

    print("KERNEL_OK")
</pallas_src>

<mosaic_0001>
module attributes {stable_mosaic.version = 11 : i64} {
  func.func @actor_kernel(%arg0: i32, %arg1: memref<8x24xf32, #tpu.memory_space<vmem>>, %arg2: memref<24x512xbf16, #tpu.memory_space<vmem>>, %arg3: memref<1x512xf32, #tpu.memory_space<vmem>>, %arg4: memref<512x384xbf16, #tpu.memory_space<vmem>>, %arg5: memref<1x384xf32, #tpu.memory_space<vmem>>, %arg6: memref<384x128xbf16, #tpu.memory_space<vmem>>, %arg7: memref<1x128xf32, #tpu.memory_space<vmem>>, %arg8: memref<1x128xf32, #tpu.memory_space<vmem>>, %arg9: memref<1x6xf32, #tpu.memory_space<vmem>>, %arg10: memref<8x128xf32, #tpu.memory_space<vmem>>) attributes {dimension_semantics = [#tpu.dimension_semantics<parallel>], iteration_bounds = array<i64: 1>, scalar_prefetch = 0 : i64, scratch_operands = 0 : i64, tpu.core_type = #tpu.core_type<tc>, window_params = [{transform_indices = @transform_0, window_bounds = array<i64: 8, 24>}, {pipeline_mode = #tpu.pipeline_mode<synchronous>, transform_indices = @transform_1, window_bounds = array<i64: 24, 512>}, {pipeline_mode = #tpu.pipeline_mode<synchronous>, transform_indices = @transform_2, window_bounds = array<i64: 1, 512>}, {pipeline_mode = #tpu.pipeline_mode<synchronous>, transform_indices = @transform_3, window_bounds = array<i64: 512, 384>}, {pipeline_mode = #tpu.pipeline_mode<synchronous>, transform_indices = @transform_4, window_bounds = array<i64: 1, 384>}, {pipeline_mode = #tpu.pipeline_mode<synchronous>, transform_indices = @transform_5, window_bounds = array<i64: 384, 128>}, {pipeline_mode = #tpu.pipeline_mode<synchronous>, transform_indices = @transform_6, window_bounds = array<i64: 1, 128>}, {pipeline_mode = #tpu.pipeline_mode<synchronous>, transform_indices = @transform_7, window_bounds = array<i64: 1, 128>}, {pipeline_mode = #tpu.pipeline_mode<synchronous>, transform_indices = @transform_8, window_bounds = array<i64: 1, 6>}, {transform_indices = @transform_9, window_bounds = array<i64: 8, 128>}]} {
    %c0 = arith.constant 0 : index
    %c0_0 = arith.constant 0 : index
    %0 = vector.load %arg1[%c0, %c0_0] : memref<8x24xf32, #tpu.memory_space<vmem>>, vector<8x24xf32>
    %1 = arith.truncf %0 : vector<8x24xf32> to vector<8x24xbf16>
    %c0_1 = arith.constant 0 : index
    %c0_2 = arith.constant 0 : index
    %2 = vector.load %arg2[%c0_1, %c0_2] : memref<24x512xbf16, #tpu.memory_space<vmem>>, vector<24x512xbf16>
    %cst = arith.constant dense<0.000000e+00> : vector<8x512xf32>
    %3 = tpu.matmul %1, %2, %cst {dimension_numbers = #tpu.dot_dimension_numbers<[1], [0], [0], [1], [0, 0, 1, 1], [], []>} : vector<8x24xbf16>, vector<24x512xbf16>, vector<8x512xf32> -> vector<8x512xf32>
    %c0_3 = arith.constant 0 : index
    %c0_4 = arith.constant 0 : index
    %4 = vector.load %arg3[%c0_3, %c0_4] : memref<1x512xf32, #tpu.memory_space<vmem>>, vector<1x512xf32>
    %5 = vector.broadcast %4 : vector<1x512xf32> to vector<8x512xf32>
    %6 = arith.addf %3, %5 : vector<8x512xf32>
    %cst_5 = arith.constant 0.000000e+00 : f32
    %7 = vector.broadcast %cst_5 : f32 to vector<8x512xf32>
    %8 = arith.maximumf %6, %7 : vector<8x512xf32>
    %9 = arith.truncf %8 : vector<8x512xf32> to vector<8x512xbf16>
    %c0_6 = arith.constant 0 : index
    %c0_7 = arith.constant 0 : index
    %10 = vector.load %arg4[%c0_6, %c0_7] : memref<512x384xbf16, #tpu.memory_space<vmem>>, vector<512x384xbf16>
    %cst_8 = arith.constant dense<0.000000e+00> : vector<8x384xf32>
    %11 = tpu.matmul %9, %10, %cst_8 {dimension_numbers = #tpu.dot_dimension_numbers<[1], [0], [0], [1], [0, 0, 1, 1], [], []>} : vector<8x512xbf16>, vector<512x384xbf16>, vector<8x384xf32> -> vector<8x384xf32>
    %c0_9 = arith.constant 0 : index
    %c0_10 = arith.constant 0 : index
    %12 = vector.load %arg5[%c0_9, %c0_10] : memref<1x384xf32, #tpu.memory_space<vmem>>, vector<1x384xf32>
    %13 = vector.broadcast %12 : vector<1x384xf32> to vector<8x384xf32>
    %14 = arith.addf %11, %13 : vector<8x384xf32>
    %cst_11 = arith.constant 0.000000e+00 : f32
    %15 = vector.broadcast %cst_11 : f32 to vector<8x384xf32>
    %16 = arith.maximumf %14, %15 : vector<8x384xf32>
    %17 = arith.truncf %16 : vector<8x384xf32> to vector<8x384xbf16>
    %c0_12 = arith.constant 0 : index
    %c0_13 = arith.constant 0 : index
    %18 = vector.load %arg6[%c0_12, %c0_13] : memref<384x128xbf16, #tpu.memory_space<vmem>>, vector<384x128xbf16>
    %cst_14 = arith.constant dense<0.000000e+00> : vector<8x128xf32>
    %19 = tpu.matmul %17, %18, %cst_14 {dimension_numbers = #tpu.dot_dimension_numbers<[1], [0], [0], [1], [0, 0, 1, 1], [], []>} : vector<8x384xbf16>, vector<384x128xbf16>, vector<8x128xf32> -> vector<8x128xf32>
    %c0_15 = arith.constant 0 : index
    %c0_16 = arith.constant 0 : index
    %20 = vector.load %arg7[%c0_15, %c0_16] : memref<1x128xf32, #tpu.memory_space<vmem>>, vector<1x128xf32>
    %21 = vector.broadcast %20 : vector<1x128xf32> to vector<8x128xf32>
    %22 = arith.addf %19, %21 : vector<8x128xf32>
    %c0_17 = arith.constant 0 : index
    %c0_18 = arith.constant 0 : index
    %23 = vector.load %arg8[%c0_17, %c0_18] : memref<1x128xf32, #tpu.memory_space<vmem>>, vector<1x128xf32>
    %24 = math.tanh %22 : vector<8x128xf32>
    %25 = vector.broadcast %23 : vector<1x128xf32> to vector<8x128xf32>
    %26 = arith.mulf %25, %24 : vector<8x128xf32>
    %c0_19 = arith.constant 0 : index
    %c0_20 = arith.constant 0 : index
    %27 = vector.load %arg10[%c0_19, %c0_20] : memref<8x128xf32, #tpu.memory_space<vmem>>, vector<8x128xf32>
    tpu.vector_store %arg10[%c0_19, %c0_20], %26 {strides = array<i32>} : memref<8x128xf32, #tpu.memory_space<vmem>>, vector<8x128xf32>,
    %c0_21 = arith.constant 0 : index
    %c0_22 = arith.constant 0 : index
    %28 = vector.load %arg9[%c0_21, %c0_22] : memref<1x6xf32, #tpu.memory_space<vmem>>, vector<1x6xf32>
    %29 = vector.extract_strided_slice %26 {offsets = [0, 0], sizes = [8, 6], strides = [1, 1]} : vector<8x128xf32> to vector<8x6xf32>
    %30 = vector.extract_strided_slice %0 {offsets = [0, 0], sizes = [8, 6], strides = [1, 1]} : vector<8x24xf32> to vector<8x6xf32>
    %31 = arith.addf %29, %30 : vector<8x6xf32>
    %cst_23 = arith.constant 0.000000e+00 : f32
    %32 = vector.broadcast %cst_23 : f32 to vector<1x6xf32>
    %33 = arith.subf %32, %28 : vector<1x6xf32>
    %34 = vector.broadcast %33 : vector<1x6xf32> to vector<8x6xf32>
    %35 = arith.maximumf %34, %31 : vector<8x6xf32>
    %36 = vector.broadcast %28 : vector<1x6xf32> to vector<8x6xf32>
    %37 = arith.minimumf %36, %35 : vector<8x6xf32>
    %c0_24 = arith.constant 0 : index
    %c0_25 = arith.constant 0 : index
    %38 = vector.load %arg10[%c0_24, %c0_25] : memref<8x128xf32, #tpu.memory_space<vmem>>, vector<8x6xf32>
    tpu.vector_store %arg10[%c0_24, %c0_25], %37 {strides = array<i32>} : memref<8x128xf32, #tpu.memory_space<vmem>>, vector<8x6xf32>,
    return
  }
  func.func @transform_0(%arg0: i32) -> (i32, i32) {
    %c0_i32 = arith.constant 0 : i32
    %c0_i32_0 = arith.constant 0 : i32
    return %arg0, %c0_i32 : i32, i32
  }
  func.func @transform_1(%arg0: i32) -> (i32, i32) {
    %c0_i32 = arith.constant 0 : i32
    %c0_i32_0 = arith.constant 0 : i32
    %c0_i32_1 = arith.constant 0 : i32
    return %c0_i32, %c0_i32_0 : i32, i32
  }
  func.func @transform_2(%arg0: i32) -> (i32, i32) {
    %c0_i32 = arith.constant 0 : i32
    %c0_i32_0 = arith.constant 0 : i32
    %c0_i32_1 = arith.constant 0 : i32
    return %c0_i32, %c0_i32_0 : i32, i32
  }
  func.func @transform_3(%arg0: i32) -> (i32, i32) {
    %c0_i32 = arith.constant 0 : i32
    %c0_i32_0 = arith.constant 0 : i32
    %c0_i32_1 = arith.constant 0 : i32
    return %c0_i32, %c0_i32_0 : i32, i32
  }
  func.func @transform_4(%arg0: i32) -> (i32, i32) {
    %c0_i32 = arith.constant 0 : i32
    %c0_i32_0 = arith.constant 0 : i32
    %c0_i32_1 = arith.constant 0 : i32
    return %c0_i32, %c0_i32_0 : i32, i32
  }
  func.func @transform_5(%arg0: i32) -> (i32, i32) {
    %c0_i32 = arith.constant 0 : i32
    %c0_i32_0 = arith.constant 0 : i32
    %c0_i32_1 = arith.constant 0 : i32
    return %c0_i32, %c0_i32_0 : i32, i32
  }
  func.func @transform_6(%arg0: i32) -> (i32, i32) {
    %c0_i32 = arith.constant 0 : i32
    %c0_i32_0 = arith.constant 0 : i32
    %c0_i32_1 = arith.constant 0 : i32
    return %c0_i32, %c0_i32_0 : i32, i32
  }
  func.func @transform_7(%arg0: i32) -> (i32, i32) {
    %c0_i32 = arith.constant 0 : i32
    %c0_i32_0 = arith.constant 0 : i32
    %c0_i32_1 = arith.constant 0 : i32
    return %c0_i32, %c0_i32_0 : i32, i32
  }
  func.func @transform_8(%arg0: i32) -> (i32, i32) {
    %c0_i32 = arith.constant 0 : i32
    %c0_i32_0 = arith.constant 0 : i32
    %c0_i32_1 = arith.constant 0 : i32
    return %c0_i32, %c0_i32_0 : i32, i32
  }
  func.func @transform_9(%arg0: i32) -> (i32, i32) {
    %c0_i32 = arith.constant 0 : i32
    %c0_i32_0 = arith.constant 0 : i32
    return %arg0, %c0_i32 : i32, i32
  }
}

</mosaic_0001>

<llo_original>
// kernel: actor_forward.1
$region0: #{actor_forward.1}
  #allocation0 [shape = 'u32[]', space=smem, size = 0x4, offset = 0x4, fixed_abs, tag = 'smem constant byte address 0x4 - core index']
  #allocation1 [shape = 'u32[144,128]{1,0:T(1,128)}', space=vmem, size = 0x12000, scoped, tag = 'internal scratch']
  %s0 = inlined_call_operand.vmem [shape: f32[8,24], index: 0, kind: input, shape index: {}]
  %s1 = inlined_call_operand.vmem [shape: bf16[24,512], index: 1, kind: input, shape index: {}]
  %s2 = inlined_call_operand.vmem [shape: f32[1,512], index: 2, kind: input, shape index: {}]
  %s3 = inlined_call_operand.vmem [shape: bf16[512,384], index: 3, kind: input, shape index: {}]
  %s4 = inlined_call_operand.vmem [shape: f32[1,384], index: 4, kind: input, shape index: {}]
  %s5 = inlined_call_operand.vmem [shape: bf16[384,128], index: 5, kind: input, shape index: {}]
  %s6 = inlined_call_operand.vmem [shape: f32[1,128], index: 6, kind: input, shape index: {}]
  %s7 = inlined_call_operand.vmem [shape: f32[1,128], index: 7, kind: input, shape index: {}]
  %s8 = inlined_call_operand.vmem [shape: f32[1,6], index: 8, kind: input, shape index: {}]
  %s9 = inlined_call_operand.vmem [shape: f32[8,128], index: 9, kind: output, shape index: {}]
  %s10 = sld [smem:[#allocation0]]
  $region46: #{actor_forward.1} parent=0
    _
  %s12 = ssub.s32 1, %s10
  %s13 = scalar_select 0, %s12, %s10
  // Predicated region
  $region2: #{actor_forward.1} parent=0 // pred_check
    _
  $region3: #{actor_forward.1} parent=0 // pred_check_branch
    %15 = sbr.rel (0) target = $region5
  $region4: #{actor_forward.1} parent=0 // pred_region
    _
  $region5: #{actor_forward.1} parent=0 // pred_fallthru
    _
  // Predicated region
  $region6: #{actor_forward.1} parent=0 // pred_check
    _
  $region7: #{actor_forward.1} parent=0 // pred_check_branch
    %17 = sbr.rel (0) target = $region9
  $region8: #{actor_forward.1} parent=0 // pred_region
    _
  $region9: #{actor_forward.1} parent=0 // pred_fallthru
    _
  // Predicated region
  $region10: #{actor_forward.1} parent=0 // pred_check
    _
  $region11: #{actor_forward.1} parent=0 // pred_check_branch
    %19 = sbr.rel (0) target = $region13
  $region12: #{actor_forward.1} parent=0 // pred_region
    _
  $region13: #{actor_forward.1} parent=0 // pred_fallthru
    _
  // Predicated region
  $region14: #{actor_forward.1} parent=0 // pred_check
    _
  $region15: #{actor_forward.1} parent=0 // pred_check_branch
    %21 = sbr.rel (0) target = $region17
  $region16: #{actor_forward.1} parent=0 // pred_region
    _
  $region17: #{actor_forward.1} parent=0 // pred_fallthru
    _
  // Predicated region
  $region18: #{actor_forward.1} parent=0 // pred_check
    _
  $region19: #{actor_forward.1} parent=0 // pred_check_branch
    %23 = sbr.rel (0) target = $region21
  $region20: #{actor_forward.1} parent=0 // pred_region
    _
  $region21: #{actor_forward.1} parent=0 // pred_fallthru
    _
  // Predicated region
  $region22: #{actor_forward.1} parent=0 // pred_check
    _
  $region23: #{actor_forward.1} parent=0 // pred_check_branch
    %25 = sbr.rel (0) target = $region25
  $region24: #{actor_forward.1} parent=0 // pred_region
    _
  $region25: #{actor_forward.1} parent=0 // pred_fallthru
    _
  // Predicated region
  $region26: #{actor_forward.1} parent=0 // pred_check
    _
  $region27: #{actor_forward.1} parent=0 // pred_check_branch
    %27 = sbr.rel (0) target = $region29
  $region28: #{actor_forward.1} parent=0 // pred_region
    _
  $region29: #{actor_forward.1} parent=0 // pred_fallthru
    _
  // Predicated region
  $region30: #{actor_forward.1} parent=0 // pred_check
    _
  $region31: #{actor_forward.1} parent=0 // pred_check_branch
    %29 = sbr.rel (0) target = $region33
  $region32: #{actor_forward.1} parent=0 // pred_region
    _
  $region33: #{actor_forward.1} parent=0 // pred_fallthru
    _
  // Predicated region
  $region34: #{actor_forward.1} parent=0 // pred_check
    _
  $region35: #{actor_forward.1} parent=0 // pred_check_branch
    %31 = sbr.rel (0) target = $region37
  $region36: #{actor_forward.1} parent=0 // pred_region
    _
  $region37: #{actor_forward.1} parent=0 // pred_fallthru
    _
  %v33 = vld [vmem:[%s0] sm:$0xff]
  %v34 = vpack.c.bf16 %v33, %v33
  %v35 = vld [vmem:[%s1] sm:$0xff]
  %v36 = vld [vmem:[%s1 + $0x8] sm:$0xff]
  %v37 = vld [vmem:[%s1 + $0x10] sm:$0xff]
  %v38 = vld [vmem:[%s1 + $0x18] sm:$0xff]
  %v39 = vld [vmem:[%s1 + $0x20] sm:$0xff]
  %v40 = vld [vmem:[%s1 + $0x28] sm:$0xff]
  %v41 = vld [vmem:[%s2] sm:$0xf]
  %v43 = vlaneseq
  %v44 = vshrl.u32 %v43, 7
  %v45 = vsub.s32 0, %v44
  %v46 = vrot.slane %v41, %v45
  %v47 = vlaneseq
  %v48 = vshrl.u32 %v47, 7
  %v49 = vsub.s32 1, %v48
  %v50 = vrot.slane %v41, %v49
  %v51 = vlaneseq
  %v52 = vshrl.u32 %v51, 7
  %v53 = vsub.s32 2, %v52
  %v54 = vrot.slane %v41, %v53
  %v55 = vlaneseq
  %v56 = vshrl.u32 %v55, 7
  %v57 = vsub.s32 3, %v56
  %v58 = vrot.slane %v41, %v57
  %v69 = vunpack.c.l.b16 %v35
  %v70 = vunpack.c.h.b16 %v35
  %v71 = vunpack.c.l.b16 %v36
  %v72 = vunpack.c.h.b16 %v36
  %v73 = vunpack.c.l.b16 %v37
  %v74 = vunpack.c.h.b16 %v37
  %v75 = vunpack.c.l.b16 %v38
  %v76 = vunpack.c.h.b16 %v38
  %v77 = vunpack.c.l.b16 %v39
  %v78 = vunpack.c.h.b16 %v39
  %v79 = vunpack.c.l.b16 %v40
  %v80 = vunpack.c.h.b16 %v40
  %v81 = vpack.c.b16 %v73, %v69
  %v82 = vpack.c.b16 %v74, %v70
  %v83 = vpack.c.b16 %v75, %v71
  %v84 = vpack.c.b16 %v76, %v72
  %v85 = vpack.c.b16 %v77, %v77
  %v86 = vpack.c.b16 %v78, %v78
  %v87 = vpack.c.b16 %v79, %v79
  %v88 = vpack.c.b16 %v80, %v80
  %vm93 = vcmask 195584
  %v95 = vsel %vm93, %v34, 0
  %vm97 = vcmask 1043456
  %v99 = vsel %vm97, %v85, 0
  %v102 = vsel %vm97, %v86, 0
  %v105 = vsel %vm97, %v87, 0
  %v108 = vsel %vm97, %v88, 0
  %110 = vmatprep.subr.bf16.mxu0 %v82
  %111 = vmatpush1.bf16.msra.mxu0 %v81
  %112 = vmatprep.subr.bf16.mxu0 %v102
  %113 = vmatpush1.bf16.msra.mxu0 %v99
  %114 = vmatprep.subr.bf16.mxu0 0
  %115 = vmatpush1.bf16.msra.mxu0 0
  %116 = vmatprep.subr.bf16.mxu0 0
  %117 = vmatpush1.bf16.msra.mxu0 0
  %118 = vmatprep.subr.bf16.mxu0 0
  %119 = vmatpush1.bf16.msra.mxu0 0
  %120 = vmatprep.subr.bf16.mxu0 0
  %121 = vmatpush1.bf16.msra.mxu0 0
  %122 = vmatprep.subr.bf16.mxu0 0
  %123 = vmatpush1.bf16.msra.mxu0 0
  %124 = vmatprep.subr.bf16.mxu0 0
  %125 = vmatpush1.bf16.msra.mxu0 0
  %126 = vmatprep.subr.bf16.mxu0 0
  %127 = vmatpush1.bf16.msra.mxu0 0
  %128 = vmatprep.subr.bf16.mxu0 0
  %129 = vmatpush1.bf16.msra.mxu0 0
  %130 = vmatprep.subr.bf16.mxu0 0
  %131 = vmatpush1.bf16.msra.mxu0 0
  %132 = vmatprep.subr.bf16.mxu0 0
  %133 = vmatpush1.bf16.msra.mxu0 0
  %134 = vmatprep.subr.bf16.mxu0 0
  %135 = vmatpush1.bf16.msra.mxu0 0
  %136 = vmatprep.subr.bf16.mxu0 0
  %137 = vmatpush1.bf16.msra.mxu0 0
  %138 = vmatprep.subr.bf16.mxu0 0
  %139 = vmatpush1.bf16.msra.mxu0 0
  %140 = vmatprep.subr.bf16.mxu0 0
  %141 = vmatpush1.bf16.msra.mxu0 0
  %142 = vmatprep.mubr.bf16.mxu0 0
  %143 = vmatmul.mubr.bf16.gmra.mrb[0].mxu0 %v95
  %v144 = vpop.f32.mrb[0].mxu0
  %v145 = vadd.f32 %v46, %v144
  %v146 = vpop.f32.mrb[0].mxu0
  %v147 = vadd.f32 %v50, %v146
  %v148 = vpop.f32.mrb[0].mxu0
  %v149 = vpop.f32.mrb[0].mxu0
  %150 = vdwg.mxu0
  %151 = vmatprep.subr.bf16.mxu0 %v84
  %152 = vmatpush1.bf16.msra.mxu0 %v83
  %153 = vmatprep.subr.bf16.mxu0 %v108
  %154 = vmatpush1.bf16.msra.mxu0 %v105
  %155 = vmatprep.subr.bf16.mxu0 0
  %156 = vmatpush1.bf16.msra.mxu0 0
  %157 = vmatprep.subr.bf16.mxu0 0
  %158 = vmatpush1.bf16.msra.mxu0 0
  %159 = vmatprep.subr.bf16.mxu0 0
  %160 = vmatpush1.bf16.msra.mxu0 0
  %161 = vmatprep.subr.bf16.mxu0 0
  %162 = vmatpush1.bf16.msra.mxu0 0
  %163 = vmatprep.subr.bf16.mxu0 0
  %164 = vmatpush1.bf16.msra.mxu0 0
  %165 = vmatprep.subr.bf16.mxu0 0
  %166 = vmatpush1.bf16.msra.mxu0 0
  %167 = vmatprep.subr.bf16.mxu0 0
  %168 = vmatpush1.bf16.msra.mxu0 0
  %169 = vmatprep.subr.bf16.mxu0 0
  %170 = vmatpush1.bf16.msra.mxu0 0
  %171 = vmatprep.subr.bf16.mxu0 0
  %172 = vmatpush1.bf16.msra.mxu0 0
  %173 = vmatprep.subr.bf16.mxu0 0
  %174 = vmatpush1.bf16.msra.mxu0 0
  %175 = vmatprep.subr.bf16.mxu0 0
  %176 = vmatpush1.bf16.msra.mxu0 0
  %177 = vmatprep.subr.bf16.mxu0 0
  %178 = vmatpush1.bf16.msra.mxu0 0
  %179 = vmatprep.subr.bf16.mxu0 0
  %180 = vmatpush1.bf16.msra.mxu0 0
  %181 = vmatprep.subr.bf16.mxu0 0
  %182 = vmatpush1.bf16.msra.mxu0 0
  %183 = vmatprep.mubr.bf16.mxu0 0
  %184 = vmatmul.mubr.bf16.gmra.mrb[0].mxu0 %v95
  %v185 = vpop.f32.mrb[0].mxu0
  %v186 = vadd.f32 %v54, %v185
  %v187 = vpop.f32.mrb[0].mxu0
  %v188 = vadd.f32 %v58, %v187
  %v189 = vpop.f32.mrb[0].mxu0
  %v190 = vpop.f32.mrb[0].mxu0
  %191 = vdwg.mxu0
  %v192 = vmax.f32 %v145, 0.0
  %v193 = vmax.f32 %v147, 0.0
  %v194 = vmax.f32 %v186, 0.0
  %v195 = vmax.f32 %v188, 0.0
  %v196 = vpack.c.bf16 %v192, %v192
  %v197 = vpack.c.bf16 %v193, %v193
  %v198 = vpack.c.bf16 %v194, %v194
  %v199 = vpack.c.bf16 %v195, %v195
  %v200 = vld [vmem:[%s3] sm:$0xff]
  %v201 = vld [vmem:[%s3 + $0x8] sm:$0xf]
  %v202 = vld [vmem:[%s3 + $0xc] sm:$0xff]
  %v203 = vld [vmem:[%s3 + $0x14] sm:$0xf]
  %v204 = vld [vmem:[%s3 + $0x18] sm:$0xff]
  %v205 = vld [vmem:[%s3 + $0x20] sm:$0xf]
  %v206 = vld [vmem:[%s3 + $0x24] sm:$0xff]
  %v207 = vld [vmem:[%s3 + $0x2c] sm:$0xf]
  %v208 = vld [vmem:[%s3 + $0x30] sm:$0xff]
  %v209 = vld [vmem:[%s3 + $0x38] sm:$0xf]
  %v210 = vld [vmem:[%s3 + $0x3c] sm:$0xff]
  %v211 = vld [vmem:[%s3 + $0x44] sm:$0xf]
  %v212 = vld [vmem:[%s3 + $0x48] sm:$0xff]
  %v213 = vld [vmem:[%s3 + $0x50] sm:$0xf]
  %v214 = vld [vmem:[%s3 + $0x54] sm:$0xff]
  %v215 = vld [vmem:[%s3 + $0x5c] sm:$0xf]
  %v216 = vld [vmem:[%s3 + $0x60] sm:$0xff]
  %v217 = vld [vmem:[%s3 + $0x68] sm:$0xf]
  %v218 = vld [vmem:[%s3 + $0x6c] sm:$0xff]
  %v219 = vld [vmem:[%s3 + $0x74] sm:$0xf]
  %v220 = vld [vmem:[%s3 + $0x78] sm:$0xff]
  %v221 = vld [vmem:[%s3 + $0x80] sm:$0xf]
  %v222 = vld [vmem:[%s3 + $0x84] sm:$0xff]
  %v223 = vld [vmem:[%s3 + $0x8c] sm:$0xf]
  %v224 = vld [vmem:[%s3 + $0x90] sm:$0xff]
  %v225 = vld [vmem:[%s3 + $0x98] sm:$0xf]
  %v226 = vld [vmem:[%s3 + $0x9c] sm:$0xff]
  %v227 = vld [vmem:[%s3 + $0xa4] sm:$0xf]
  %v228 = vld [vmem:[%s3 + $0xa8] sm:$0xff]
  %v229 = vld [vmem:[%s3 + $0xb0] sm:$0xf]
  %v230 = vld [vmem:[%s3 + $0xb4] sm:$0xff]
  %v231 = vld [vmem:[%s3 + $0xbc] sm:$0xf]
  %v232 = vld [vmem:[%s3 + $0xc0] sm:$0xff]
  %v233 = vld [vmem:[%s3 + $0xc8] sm:$0xf]
  %v234 = vld [vmem:[%s3 + $0xcc] sm:$0xff]
  %v235 = vld [vmem:[%s3 + $0xd4] sm:$0xf]
  %v236 = vld [vmem:[%s3 + $0xd8] sm:$0xff]
  %v237 = vld [vmem:[%s3 + $0xe0] sm:$0xf]
  %v238 = vld [vmem:[%s3 + $0xe4] sm:$0xff]
  %v239 = vld [vmem:[%s3 + $0xec] sm:$0xf]
  %v240 = vld [vmem:[%s3 + $0xf0] sm:$0xff]
  %v241 = vld [vmem:[%s3 + $0xf8] sm:$0xf]
  %v242 = vld [vmem:[%s3 + $0xfc] sm:$0xff]
  %v243 = vld [vmem:[%s3 + $0x104] sm:$0xf]
  %v244 = vld [vmem:[%s3 + $0x108] sm:$0xff]
  %v245 = vld [vmem:[%s3 + $0x110] sm:$0xf]
  %v246 = vld [vmem:[%s3 + $0x114] sm:$0xff]
  %v247 = vld [vmem:[%s3 + $0x11c] sm:$0xf]
  %v248 = vld [vmem:[%s3 + $0x120] sm:$0xff]
  %v249 = vld [vmem:[%s3 + $0x128] sm:$0xf]
  %v250 = vld [vmem:[%s3 + $0x12c] sm:$0xff]
  %v251 = vld [vmem:[%s3 + $0x134] sm:$0xf]
  %v252 = vld [vmem:[%s3 + $0x138] sm:$0xff]
  %v253 = vld [vmem:[%s3 + $0x140] sm:$0xf]
  %v254 = vld [vmem:[%s3 + $0x144] sm:$0xff]
  %v255 = vld [vmem:[%s3 + $0x14c] sm:$0xf]
  %v256 = vld [vmem:[%s3 + $0x150] sm:$0xff]
  %v257 = vld [vmem:[%s3 + $0x158] sm:$0xf]
  %v258 = vld [vmem:[%s3 + $0x15c] sm:$0xff]
  %v259 = vld [vmem:[%s3 + $0x164] sm:$0xf]
  %v260 = vld [vmem:[%s3 + $0x168] sm:$0xff]
  %v261 = vld [vmem:[%s3 + $0x170] sm:$0xf]
  %v262 = vld [vmem:[%s3 + $0x174] sm:$0xff]
  %v263 = vld [vmem:[%s3 + $0x17c] sm:$0xf]
  %v264 = vld [vmem:[%s3 + $0x180] sm:$0xff]
  %v265 = vld [vmem:[%s3 + $0x188] sm:$0xf]
  %v266 = vld [vmem:[%s3 + $0x18c] sm:$0xff]
  %v267 = vld [vmem:[%s3 + $0x194] sm:$0xf]
  %v268 = vld [vmem:[%s3 + $0x198] sm:$0xff]
  %v269 = vld [vmem:[%s3 + $0x1a0] sm:$0xf]
  %v270 = vld [vmem:[%s3 + $0x1a4] sm:$0xff]
  %v271 = vld [vmem:[%s3 + $0x1ac] sm:$0xf]
  %v272 = vld [vmem:[%s3 + $0x1b0] sm:$0xff]
  %v273 = vld [vmem:[%s3 + $0x1b8] sm:$0xf]
  %v274 = vld [vmem:[%s3 + $0x1bc] sm:$0xff]
  %v275 = vld [vmem:[%s3 + $0x1c4] sm:$0xf]
  %v276 = vld [vmem:[%s3 + $0x1c8] sm:$0xff]
  %v277 = vld [vmem:[%s3 + $0x1d0] sm:$0xf]
  %v278 = vld [vmem:[%s3 + $0x1d4] sm:$0xff]
  %v279 = vld [vmem:[%s3 + $0x1dc] sm:$0xf]
  %v280 = vld [vmem:[%s3 + $0x1e0] sm:$0xff]
  %v281 = vld [vmem:[%s3 + $0x1e8] sm:$0xf]
  %v282 = vld [vmem:[%s3 + $0x1ec] sm:$0xff]
  %v283 = vld [vmem:[%s3 + $0x1f4] sm:$0xf]
  %v284 = vld [vmem:[%s3 + $0x1f8] sm:$0xff]
  %v285 = vld [vmem:[%s3 + $0x200] sm:$0xf]
  %v286 = vld [vmem:[%s3 + $0x204] sm:$0xff]
  %v287 = vld [vmem:[%s3 + $0x20c] sm:$0xf]
  %v288 = vld [vmem:[%s3 + $0x210] sm:$0xff]
  %v289 = vld [vmem:[%s3 + $0x218] sm:$0xf]
  %v290 = vld [vmem:[%s3 + $0x21c] sm:$0xff]
  %v291 = vld [vmem:[%s3 + $0x224] sm:$0xf]
  %v292 = vld [vmem:[%s3 + $0x228] sm:$0xff]
  %v293 = vld [vmem:[%s3 + $0x230] sm:$0xf]
  %v294 = vld [vmem:[%s3 + $0x234] sm:$0xff]
  %v295 = vld [vmem:[%s3 + $0x23c] sm:$0xf]
  %v296 = vld [vmem:[%s3 + $0x240] sm:$0xff]
  %v297 = vld [vmem:[%s3 + $0x248] sm:$0xf]
  %v298 = vld [vmem:[%s3 + $0x24c] sm:$0xff]
  %v299 = vld [vmem:[%s3 + $0x254] sm:$0xf]
  %v300 = vld [vmem:[%s3 + $0x258] sm:$0xff]
  %v301 = vld [vmem:[%s3 + $0x260] sm:$0xf]
  %v302 = vld [vmem:[%s3 + $0x264] sm:$0xff]
  %v303 = vld [vmem:[%s3 + $0x26c] sm:$0xf]
  %v304 = vld [vmem:[%s3 + $0x270] sm:$0xff]
  %v305 = vld [vmem:[%s3 + $0x278] sm:$0xf]
  %v306 = vld [vmem:[%s3 + $0x27c] sm:$0xff]
  %v307 = vld [vmem:[%s3 + $0x284] sm:$0xf]
  %v308 = vld [vmem:[%s3 + $0x288] sm:$0xff]
  %v309 = vld [vmem:[%s3 + $0x290] sm:$0xf]
  %v310 = vld [vmem:[%s3 + $0x294] sm:$0xff]
  %v311 = vld [vmem:[%s3 + $0x29c] sm:$0xf]
  %v312 = vld [vmem:[%s3 + $0x2a0] sm:$0xff]
  %v313 = vld [vmem:[%s3 + $0x2a8] sm:$0xf]
  %v314 = vld [vmem:[%s3 + $0x2ac] sm:$0xff]
  %v315 = vld [vmem:[%s3 + $0x2b4] sm:$0xf]
  %v316 = vld [vmem:[%s3 + $0x2b8] sm:$0xff]
  %v317 = vld [vmem:[%s3 + $0x2c0] sm:$0xf]
  %v318 = vld [vmem:[%s3 + $0x2c4] sm:$0xff]
  %v319 = vld [vmem:[%s3 + $0x2cc] sm:$0xf]
  %v320 = vld [vmem:[%s3 + $0x2d0] sm:$0xff]
  %v321 = vld [vmem:[%s3 + $0x2d8] sm:$0xf]
  %v322 = vld [vmem:[%s3 + $0x2dc] sm:$0xff]
  %v323 = vld [vmem:[%s3 + $0x2e4] sm:$0xf]
  %v324 = vld [vmem:[%s3 + $0x2e8] sm:$0xff]
  %v325 = vld [vmem:[%s3 + $0x2f0] sm:$0xf]
  %v326 = vld [vmem:[%s3 + $0x2f4] sm:$0xff]
  %v327 = vld [vmem:[%s3 + $0x2fc] sm:$0xf]
  %v328 = vld [vmem:[%s4] sm:$0x7]
  %v330 = vlaneseq
  %v331 = vshrl.u32 %v330, 7
  %v332 = vsub.s32 0, %v331
  %v333 = vrot.slane %v328, %v332
  %v334 = vlaneseq
  %v335 = vshrl.u32 %v334, 7
  %v336 = vsub.s32 1, %v335
  %v337 = vrot.slane %v328, %v336
  %v338 = vlaneseq
  %v339 = vshrl.u32 %v338, 7
  %v340 = vsub.s32 2, %v339
  %v341 = vrot.slane %v328, %v340
  %v473 = vunpack.c.l.b16 %v200
  %v474 = vunpack.c.h.b16 %v200
  %v475 = vunpack.c.l.b16 %v201
  %v476 = vunpack.c.l.b16 %v202
  %v477 = vunpack.c.h.b16 %v202
  %v478 = vunpack.c.l.b16 %v203
  %v479 = vunpack.c.l.b16 %v204
  %v480 = vunpack.c.h.b16 %v204
  %v481 = vunpack.c.l.b16 %v205
  %v482 = vunpack.c.l.b16 %v206
  %v483 = vunpack.c.h.b16 %v206
  %v484 = vunpack.c.l.b16 %v207
  %v485 = vunpack.c.l.b16 %v208
  %v486 = vunpack.c.h.b16 %v208
  %v487 = vunpack.c.l.b16 %v209
  %v488 = vunpack.c.l.b16 %v210
  %v489 = vunpack.c.h.b16 %v210
  %v490 = vunpack.c.l.b16 %v211
  %v491 = vunpack.c.l.b16 %v212
  %v492 = vunpack.c.h.b16 %v212
  %v493 = vunpack.c.l.b16 %v213
  %v494 = vunpack.c.l.b16 %v214
  %v495 = vunpack.c.h.b16 %v214
  %v496 = vunpack.c.l.b16 %v215
  %v497 = vunpack.c.l.b16 %v216
  %v498 = vunpack.c.h.b16 %v216
  %v499 = vunpack.c.l.b16 %v217
  %v500 = vunpack.c.l.b16 %v218
  %v501 = vunpack.c.h.b16 %v218
  %v502 = vunpack.c.l.b16 %v219
  %v503 = vunpack.c.l.b16 %v220
  %v504 = vunpack.c.h.b16 %v220
  %v505 = vunpack.c.l.b16 %v221
  %v506 = vunpack.c.l.b16 %v222
  %v507 = vunpack.c.h.b16 %v222
  %v508 = vunpack.c.l.b16 %v223
  %v509 = vunpack.c.l.b16 %v224
  %v510 = vunpack.c.h.b16 %v224
  %v511 = vunpack.c.l.b16 %v225
  %v512 = vunpack.c.l.b16 %v226
  %v513 = vunpack.c.h.b16 %v226
  %v514 = vunpack.c.l.b16 %v227
  %v515 = vunpack.c.l.b16 %v228
  %v516 = vunpack.c.h.b16 %v228
  %v517 = vunpack.c.l.b16 %v229
  %v518 = vunpack.c.l.b16 %v230
  %v519 = vunpack.c.h.b16 %v230
  %v520 = vunpack.c.l.b16 %v231
  %v521 = vunpack.c.l.b16 %v232
  %v522 = vunpack.c.h.b16 %v232
  %v523 = vunpack.c.l.b16 %v233
  %v524 = vunpack.c.l.b16 %v234
  %v525 = vunpack.c.h.b16 %v234
  %v526 = vunpack.c.l.b16 %v235
  %v527 = vunpack.c.l.b16 %v236
  %v528 = vunpack.c.h.b16 %v236
  %v529 = vunpack.c.l.b16 %v237
  %v530 = vunpack.c.l.b16 %v238
  %v531 = vunpack.c.h.b16 %v238
  %v532 = vunpack.c.l.b16 %v239
  %v533 = vunpack.c.l.b16 %v240
  %v534 = vunpack.c.h.b16 %v240
  %v535 = vunpack.c.l.b16 %v241
  %v536 = vunpack.c.l.b16 %v242
  %v537 = vunpack.c.h.b16 %v242
  %v538 = vunpack.c.l.b16 %v243
  %v539 = vunpack.c.l.b16 %v244
  %v540 = vunpack.c.h.b16 %v244
  %v541 = vunpack.c.l.b16 %v245
  %v542 = vunpack.c.l.b16 %v246
  %v543 = vunpack.c.h.b16 %v246
  %v544 = vunpack.c.l.b16 %v247
  %v545 = vunpack.c.l.b16 %v248
  %v546 = vunpack.c.h.b16 %v248
  %v547 = vunpack.c.l.b16 %v249
  %v548 = vunpack.c.l.b16 %v250
  %v549 = vunpack.c.h.b16 %v250
  %v550 = vunpack.c.l.b16 %v251
  %v551 = vunpack.c.l.b16 %v252
  %v552 = vunpack.c.h.b16 %v252
  %v553 = vunpack.c.l.b16 %v253
  %v554 = vunpack.c.l.b16 %v254
  %v555 = vunpack.c.h.b16 %v254
  %v556 = vunpack.c.l.b16 %v255
  %v557 = vunpack.c.l.b16 %v256
  %v558 = vunpack.c.h.b16 %v256
  %v559 = vunpack.c.l.b16 %v257
  %v560 = vunpack.c.l.b16 %v258
  %v561 = vunpack.c.h.b16 %v258
  %v562 = vunpack.c.l.b16 %v259
  %v563 = vunpack.c.l.b16 %v260
  %v564 = vunpack.c.h.b16 %v260
  %v565 = vunpack.c.l.b16 %v261
  %v566 = vunpack.c.l.b16 %v262
  %v567 = vunpack.c.h.b16 %v262
  %v568 = vunpack.c.l.b16 %v263
  %v569 = vunpack.c.l.b16 %v264
  %v570 = vunpack.c.h.b16 %v264
  %v571 = vunpack.c.l.b16 %v265
  %v572 = vunpack.c.l.b16 %v266
  %v573 = vunpack.c.h.b16 %v266
  %v574 = vunpack.c.l.b16 %v267
  %v575 = vunpack.c.l.b16 %v268
  %v576 = vunpack.c.h.b16 %v268
  %v577 = vunpack.c.l.b16 %v269
  %v578 = vunpack.c.l.b16 %v270
  %v579 = vunpack.c.h.b16 %v270
  %v580 = vunpack.c.l.b16 %v271
  %v581 = vunpack.c.l.b16 %v272
  %v582 = vunpack.c.h.b16 %v272
  %v583 = vunpack.c.l.b16 %v273
  %v584 = vunpack.c.l.b16 %v274
  %v585 = vunpack.c.h.b16 %v274
  %v586 = vunpack.c.l.b16 %v275
  %v587 = vunpack.c.l.b16 %v276
  %v588 = vunpack.c.h.b16 %v276
  %v589 = vunpack.c.l.b16 %v277
  %v590 = vunpack.c.l.b16 %v278
  %v591 = vunpack.c.h.b16 %v278
  %v592 = vunpack.c.l.b16 %v279
  %v593 = vunpack.c.l.b16 %v280
  %v594 = vunpack.c.h.b16 %v280
  %v595 = vunpack.c.l.b16 %v281
  %v596 = vunpack.c.l.b16 %v282
  %v597 = vunpack.c.h.b16 %v282
  %v598 = vunpack.c.l.b16 %v283
  %v599 = vunpack.c.l.b16 %v284
  %v600 = vunpack.c.h.b16 %v284
  %v601 = vunpack.c.l.b16 %v285
  %v602 = vunpack.c.l.b16 %v286
  %v603 = vunpack.c.h.b16 %v286
  %v604 = vunpack.c.l.b16 %v287
  %v605 = vunpack.c.l.b16 %v288
  %v606 = vunpack.c.h.b16 %v288
  %v607 = vunpack.c.l.b16 %v289
  %v608 = vunpack.c.l.b16 %v290
  %v609 = vunpack.c.h.b16 %v290
  %v610 = vunpack.c.l.b16 %v291
  %v611 = vunpack.c.l.b16 %v292
  %v612 = vunpack.c.h.b16 %v292
  %v613 = vunpack.c.l.b16 %v293
  %v614 = vunpack.c.l.b16 %v294
  %v615 = vunpack.c.h.b16 %v294
  %v616 = vunpack.c.l.b16 %v295
  %v617 = vunpack.c.l.b16 %v296
  %v618 = vunpack.c.h.b16 %v296
  %v619 = vunpack.c.l.b16 %v297
  %v620 = vunpack.c.l.b16 %v298
  %v621 = vunpack.c.h.b16 %v298
  %v622 = vunpack.c.l.b16 %v299
  %v623 = vunpack.c.l.b16 %v300
  %v624 = vunpack.c.h.b16 %v300
  %v625 = vunpack.c.l.b16 %v301
  %v626 = vunpack.c.l.b16 %v302
  %v627 = vunpack.c.h.b16 %v302
  %v628 = vunpack.c.l.b16 %v303
  %v629 = vunpack.c.l.b16 %v304
  %v630 = vunpack.c.h.b16 %v304
  %v631 = vunpack.c.l.b16 %v305
  %v632 = vunpack.c.l.b16 %v306
  %v633 = vunpack.c.h.b16 %v306
  %v634 = vunpack.c.l.b16 %v307
  %v635 = vunpack.c.l.b16 %v308
  %v636 = vunpack.c.h.b16 %v308
  %v637 = vunpack.c.l.b16 %v309
  %v638 = vunpack.c.l.b16 %v310
  %v639 = vunpack.c.h.b16 %v310
  %v640 = vunpack.c.l.b16 %v311
  %v641 = vunpack.c.l.b16 %v312
  %v642 = vunpack.c.h.b16 %v312
  %v643 = vunpack.c.l.b16 %v313
  %v644 = vunpack.c.l.b16 %v314
  %v645 = vunpack.c.h.b16 %v314
  %v646 = vunpack.c.l.b16 %v315
  %v647 = vunpack.c.l.b16 %v316
  %v648 = vunpack.c.h.b16 %v316
  %v649 = vunpack.c.l.b16 %v317
  %v650 = vunpack.c.l.b16 %v318
  %v651 = vunpack.c.h.b16 %v318
  %v652 = vunpack.c.l.b16 %v319
  %v653 = vunpack.c.l.b16 %v320
  %v654 = vunpack.c.h.b16 %v320
  %v655 = vunpack.c.l.b16 %v321
  %v656 = vunpack.c.l.b16 %v322
  %v657 = vunpack.c.h.b16 %v322
  %v658 = vunpack.c.l.b16 %v323
  %v659 = vunpack.c.l.b16 %v324
  %v660 = vunpack.c.h.b16 %v324
  %v661 = vunpack.c.l.b16 %v325
  %v662 = vunpack.c.l.b16 %v326
  %v663 = vunpack.c.h.b16 %v326
  %v664 = vunpack.c.l.b16 %v327
  %v665 = vpack.c.b16 %v476, %v473
  %v666 = vpack.c.b16 %v477, %v474
  %v667 = vpack.c.b16 %v478, %v475
  %v668 = vpack.c.b16 %v482, %v479
  %v669 = vpack.c.b16 %v483, %v480
  %v670 = vpack.c.b16 %v484, %v481
  %v671 = vpack.c.b16 %v488, %v485
  %v672 = vpack.c.b16 %v489, %v486
  %v673 = vpack.c.b16 %v490, %v487
  %v674 = vpack.c.b16 %v494, %v491
  %v675 = vpack.c.b16 %v495, %v492
  %v676 = vpack.c.b16 %v496, %v493
  %v677 = vpack.c.b16 %v500, %v497
  %v678 = vpack.c.b16 %v501, %v498
  %v679 = vpack.c.b16 %v502, %v499
  %v680 = vpack.c.b16 %v506, %v503
  %v681 = vpack.c.b16 %v507, %v504
  %v682 = vpack.c.b16 %v508, %v505
  %v683 = vpack.c.b16 %v512, %v509
  %v684 = vpack.c.b16 %v513, %v510
  %v685 = vpack.c.b16 %v514, %v511
  %v686 = vpack.c.b16 %v518, %v515
  %v687 = vpack.c.b16 %v519, %v516
  %v688 = vpack.c.b16 %v520, %v517
  %v689 = vpack.c.b16 %v524, %v521
  %v690 = vpack.c.b16 %v525, %v522
  %v691 = vpack.c.b16 %v526, %v523
  %v692 = vpack.c.b16 %v530, %v527
  %v693 = vpack.c.b16 %v531, %v528
  %v694 = vpack.c.b16 %v532, %v529
  %v695 = vpack.c.b16 %v536, %v533
  %v696 = vpack.c.b16 %v537, %v534
  %v697 = vpack.c.b16 %v538, %v535
  %v698 = vpack.c.b16 %v542, %v539
  %v699 = vpack.c.b16 %v543, %v540
  %v700 = vpack.c.b16 %v544, %v541
  %v701 = vpack.c.b16 %v548, %v545
  %v702 = vpack.c.b16 %v549, %v546
  %v703 = vpack.c.b16 %v550, %v547
  %v704 = vpack.c.b16 %v554, %v551
  %v705 = vpack.c.b16 %v555, %v552
  %v706 = vpack.c.b16 %v556, %v553
  %v707 = vpack.c.b16 %v560, %v557
  %v708 = vpack.c.b16 %v561, %v558
  %v709 = vpack.c.b16 %v562, %v559
  %v710 = vpack.c.b16 %v566, %v563
  %v711 = vpack.c.b16 %v567, %v564
  %v712 = vpack.c.b16 %v568, %v565
  %v713 = vpack.c.b16 %v572, %v569
  %v714 = vpack.c.b16 %v573, %v570
  %v715 = vpack.c.b16 %v574, %v571
  %v716 = vpack.c.b16 %v578, %v575
  %v717 = vpack.c.b16 %v579, %v576
  %v718 = vpack.c.b16 %v580, %v577
  %v719 = vpack.c.b16 %v584, %v581
  %v720 = vpack.c.b16 %v585, %v582
  %v721 = vpack.c.b16 %v586, %v583
  %v722 = vpack.c.b16 %v590, %v587
  %v723 = vpack.c.b16 %v591, %v588
  %v724 = vpack.c.b16 %v592, %v589
  %v725 = vpack.c.b16 %v596, %v593
  %v726 = vpack.c.b16 %v597, %v594
  %v727 = vpack.c.b16 %v598, %v595
  %v728 = vpack.c.b16 %v602, %v599
  %v729 = vpack.c.b16 %v603, %v600
  %v730 = vpack.c.b16 %v604, %v601
  %v731 = vpack.c.b16 %v608, %v605
  %v732 = vpack.c.b16 %v609, %v606
  %v733 = vpack.c.b16 %v610, %v607
  %v734 = vpack.c.b16 %v614, %v611
  %v735 = vpack.c.b16 %v615, %v612
  %v736 = vpack.c.b16 %v616, %v613
  %v737 = vpack.c.b16 %v620, %v617
  %v738 = vpack.c.b16 %v621, %v618
  %v739 = vpack.c.b16 %v622, %v619
  %v740 = vpack.c.b16 %v626, %v623
  %v741 = vpack.c.b16 %v627, %v624
  %v742 = vpack.c.b16 %v628, %v625
  %v743 = vpack.c.b16 %v632, %v629
  %v744 = vpack.c.b16 %v633, %v630
  %v745 = vpack.c.b16 %v634, %v631
  %v746 = vpack.c.b16 %v638, %v635
  %v747 = vpack.c.b16 %v639, %v636
  %v748 = vpack.c.b16 %v640, %v637
  %v749 = vpack.c.b16 %v644, %v641
  %v750 = vpack.c.b16 %v645, %v642
  %v751 = vpack.c.b16 %v646, %v643
  %v752 = vpack.c.b16 %v650, %v647
  %v753 = vpack.c.b16 %v651, %v648
  %v754 = vpack.c.b16 %v652, %v649
  %v755 = vpack.c.b16 %v656, %v653
  %v756 = vpack.c.b16 %v657, %v654
  %v757 = vpack.c.b16 %v658, %v655
  %v758 = vpack.c.b16 %v662, %v659
  %v759 = vpack.c.b16 %v663, %v660
  %v760 = vpack.c.b16 %v664, %v661
  %857 = vmatprep.subr.bf16.mxu0 %v666
  %858 = vmatpush1.bf16.msra.mxu0 %v665
  %859 = vmatprep.subr.bf16.mxu0 %v669
  %860 = vmatpush1.bf16.msra.mxu0 %v668
  %861 = vmatprep.subr.bf16.mxu0 %v672
  %862 = vmatpush1.bf16.msra.mxu0 %v671
  %863 = vmatprep.subr.bf16.mxu0 %v675
  %864 = vmatpush1.bf16.msra.mxu0 %v674
  %865 = vmatprep.subr.bf16.mxu0 %v678
  %866 = vmatpush1.bf16.msra.mxu0 %v677
  %867 = vmatprep.subr.bf16.mxu0 %v681
  %868 = vmatpush1.bf16.msra.mxu0 %v680
  %869 = vmatprep.subr.bf16.mxu0 %v684
  %870 = vmatpush1.bf16.msra.mxu0 %v683
  %871 = vmatprep.subr.bf16.mxu0 %v687
  %872 = vmatpush1.bf16.msra.mxu0 %v686
  %873 = vmatprep.subr.bf16.mxu0 %v690
  %874 = vmatpush1.bf16.msra.mxu0 %v689
  %875 = vmatprep.subr.bf16.mxu0 %v693
  %876 = vmatpush1.bf16.msra.mxu0 %v692
  %877 = vmatprep.subr.bf16.mxu0 %v696
  %878 = vmatpush1.bf16.msra.mxu0 %v695
  %879 = vmatprep.subr.bf16.mxu0 %v699
  %880 = vmatpush1.bf16.msra.mxu0 %v698
  %881 = vmatprep.subr.bf16.mxu0 %v702
  %882 = vmatpush1.bf16.msra.mxu0 %v701
  %883 = vmatprep.subr.bf16.mxu0 %v705
  %884 = vmatpush1.bf16.msra.mxu0 %v704
  %885 = vmatprep.subr.bf16.mxu0 %v708
  %886 = vmatpush1.bf16.msra.mxu0 %v707
  %887 = vmatprep.subr.bf16.mxu0 %v711
  %888 = vmatpush1.bf16.msra.mxu0 %v710
  %889 = vmatprep.mubr.bf16.mxu0 %v197
  %890 = vmatmul.mubr.bf16.gmra.mrb[0].mxu0 %v196
  %v891 = vpop.f32.mrb[0].mxu0
  %v892 = vadd.f32 %v333, %v891
  %v893 = vpop.f32.mrb[0].mxu0
  %v894 = vadd.f32 %v337, %v893
  %v895 = vpop.f32.mrb[0].mxu0
  %v896 = vpop.f32.mrb[0].mxu0
  %897 = vdwg.mxu0
  %898 = vmatprep.subr.bf16.mxu0 %v714
  %899 = vmatpush1.bf16.msra.mxu0 %v713
  %900 = vmatprep.subr.bf16.mxu0 %v717
  %901 = vmatpush1.bf16.msra.mxu0 %v716
  %902 = vmatprep.subr.bf16.mxu0 %v720
  %903 = vmatpush1.bf16.msra.mxu0 %v719
  %904 = vmatprep.subr.bf16.mxu0 %v723
  %905 = vmatpush1.bf16.msra.mxu0 %v722
  %906 = vmatprep.subr.bf16.mxu0 %v726
  %907 = vmatpush1.bf16.msra.mxu0 %v725
  %908 = vmatprep.subr.bf16.mxu0 %v729
  %909 = vmatpush1.bf16.msra.mxu0 %v728
  %910 = vmatprep.subr.bf16.mxu0 %v732
  %911 = vmatpush1.bf16.msra.mxu0 %v731
  %912 = vmatprep.subr.bf16.mxu0 %v735
  %913 = vmatpush1.bf16.msra.mxu0 %v734
  %914 = vmatprep.subr.bf16.mxu0 %v738
  %915 = vmatpush1.bf16.msra.mxu0 %v737
  %916 = vmatprep.subr.bf16.mxu0 %v741
  %917 = vmatpush1.bf16.msra.mxu0 %v740
  %918 = vmatprep.subr.bf16.mxu0 %v744
  %919 = vmatpush1.bf16.msra.mxu0 %v743
  %920 = vmatprep.subr.bf16.mxu0 %v747
  %921 = vmatpush1.bf16.msra.mxu0 %v746
  %922 = vmatprep.subr.bf16.mxu0 %v750
  %923 = vmatpush1.bf16.msra.mxu0 %v749
  %924 = vmatprep.subr.bf16.mxu0 %v753
  %925 = vmatpush1.bf16.msra.mxu0 %v752
  %926 = vmatprep.subr.bf16.mxu0 %v756
  %927 = vmatpush1.bf16.msra.mxu0 %v755
  %928 = vmatprep.subr.bf16.mxu0 %v759
  %929 = vmatpush1.bf16.msra.mxu0 %v758
  %930 = vmatprep.mubr.bf16.mxu0 %v199
  %931 = vmatmul.mubr.bf16.gmra.mrb[0].mxu0 %v198
  %v932 = vpop.f32.mrb[0].mxu0
  %v933 = vadd.f32 %v892, %v932
  %v934 = vpop.f32.mrb[0].mxu0
  %v935 = vadd.f32 %v894, %v934
  %v936 = vpop.f32.mrb[0].mxu0
  %v937 = vpop.f32.mrb[0].mxu0
  %938 = vdwg.mxu0
  %939 = vmatprep.subr.bf16.mxu0 0
  %940 = vmatpush1.bf16.msra.mxu0 %v667
  %941 = vmatprep.subr.bf16.mxu0 0
  %942 = vmatpush1.bf16.msra.mxu0 %v670
  %943 = vmatprep.subr.bf16.mxu0 0
  %944 = vmatpush1.bf16.msra.mxu0 %v673
  %945 = vmatprep.subr.bf16.mxu0 0
  %946 = vmatpush1.bf16.msra.mxu0 %v676
  %947 = vmatprep.subr.bf16.mxu0 0
  %948 = vmatpush1.bf16.msra.mxu0 %v679
  %949 = vmatprep.subr.bf16.mxu0 0
  %950 = vmatpush1.bf16.msra.mxu0 %v682
  %951 = vmatprep.subr.bf16.mxu0 0
  %952 = vmatpush1.bf16.msra.mxu0 %v685
  %953 = vmatprep.subr.bf16.mxu0 0
  %954 = vmatpush1.bf16.msra.mxu0 %v688
  %955 = vmatprep.subr.bf16.mxu0 0
  %956 = vmatpush1.bf16.msra.mxu0 %v691
  %957 = vmatprep.subr.bf16.mxu0 0
  %958 = vmatpush1.bf16.msra.mxu0 %v694
  %959 = vmatprep.subr.bf16.mxu0 0
  %960 = vmatpush1.bf16.msra.mxu0 %v697
  %961 = vmatprep.subr.bf16.mxu0 0
  %962 = vmatpush1.bf16.msra.mxu0 %v700
  %963 = vmatprep.subr.bf16.mxu0 0
  %964 = vmatpush1.bf16.msra.mxu0 %v703
  %965 = vmatprep.subr.bf16.mxu0 0
  %966 = vmatpush1.bf16.msra.mxu0 %v706
  %967 = vmatprep.subr.bf16.mxu0 0
  %968 = vmatpush1.bf16.msra.mxu0 %v709
  %969 = vmatprep.subr.bf16.mxu0 0
  %970 = vmatpush1.bf16.msra.mxu0 %v712
  %971 = vmatprep.mubr.bf16.mxu0 %v197
  %972 = vmatmul.mubr.bf16.gmra.mrb[0].mxu0 %v196
  %v973 = vpop.f32.mrb[0].mxu0
  %v974 = vadd.f32 %v341, %v973
  %v975 = vpop.f32.mrb[0].mxu0
  %v976 = vpop.f32.mrb[0].mxu0
  %v977 = vpop.f32.mrb[0].mxu0
  %978 = vdwg.mxu0
  %979 = vmatprep.subr.bf16.mxu0 0
  %980 = vmatpush1.bf16.msra.mxu0 %v715
  %981 = vmatprep.subr.bf16.mxu0 0
  %982 = vmatpush1.bf16.msra.mxu0 %v718
  %983 = vmatprep.subr.bf16.mxu0 0
  %984 = vmatpush1.bf16.msra.mxu0 %v721
  %985 = vmatprep.subr.bf16.mxu0 0
  %986 = vmatpush1.bf16.msra.mxu0 %v724
  %987 = vmatprep.subr.bf16.mxu0 0
  %988 = vmatpush1.bf16.msra.mxu0 %v727
  %989 = vmatprep.subr.bf16.mxu0 0
  %990 = vmatpush1.bf16.msra.mxu0 %v730
  %991 = vmatprep.subr.bf16.mxu0 0
  %992 = vmatpush1.bf16.msra.mxu0 %v733
  %993 = vmatprep.subr.bf16.mxu0 0
  %994 = vmatpush1.bf16.msra.mxu0 %v736
  %995 = vmatprep.subr.bf16.mxu0 0
  %996 = vmatpush1.bf16.msra.mxu0 %v739
  %997 = vmatprep.subr.bf16.mxu0 0
  %998 = vmatpush1.bf16.msra.mxu0 %v742
  %999 = vmatprep.subr.bf16.mxu0 0
  %1000 = vmatpush1.bf16.msra.mxu0 %v745
  %1001 = vmatprep.subr.bf16.mxu0 0
  %1002 = vmatpush1.bf16.msra.mxu0 %v748
  %1003 = vmatprep.subr.bf16.mxu0 0
  %1004 = vmatpush1.bf16.msra.mxu0 %v751
  %1005 = vmatprep.subr.bf16.mxu0 0
  %1006 = vmatpush1.bf16.msra.mxu0 %v754
  %1007 = vmatprep.subr.bf16.mxu0 0
  %1008 = vmatpush1.bf16.msra.mxu0 %v757
  %1009 = vmatprep.subr.bf16.mxu0 0
  %1010 = vmatpush1.bf16.msra.mxu0 %v760
  %1011 = vmatprep.mubr.bf16.mxu0 %v199
  %1012 = vmatmul.mubr.bf16.gmra.mrb[0].mxu0 %v198
  %v1013 = vpop.f32.mrb[0].mxu0
  %v1014 = vadd.f32 %v974, %v1013
  %v1015 = vpop.f32.mrb[0].mxu0
  %v1016 = vpop.f32.mrb[0].mxu0
  %v1017 = vpop.f32.mrb[0].mxu0
  %1018 = vdwg.mxu0
  %v1019 = vmax.f32 %v933, 0.0
  %v1020 = vmax.f32 %v935, 0.0
  %v1021 = vmax.f32 %v1014, 0.0
  %v1022 = vpack.c.bf16 %v1019, %v1019
  %v1023 = vpack.c.bf16 %v1020, %v1020
  %v1024 = vpack.c.bf16 %v1021, %v1021
  %v1025 = vld [vmem:[%s5] sm:$0xf]
  %v1026 = vld [vmem:[%s5 + $0x4] sm:$0xf]
  %v1027 = vld [vmem:[%s5 + $0x8] sm:$0xf]
  %v1028 = vld [vmem:[%s5 + $0xc] sm:$0xf]
  %v1029 = vld [vmem:[%s5 + $0x10] sm:$0xf]
  %v1030 = vld [vmem:[%s5 + $0x14] sm:$0xf]
  %v1031 = vld [vmem:[%s5 + $0x18] sm:$0xf]
  %v1032 = vld [vmem:[%s5 + $0x1c] sm:$0xf]
  %v1033 = vld [vmem:[%s5 + $0x20] sm:$0xf]
  %v1034 = vld [vmem:[%s5 + $0x24] sm:$0xf]
  %v1035 = vld [vmem:[%s5 + $0x28] sm:$0xf]
  %v1036 = vld [vmem:[%s5 + $0x2c] sm:$0xf]
  %v1037 = vld [vmem:[%s5 + $0x30] sm:$0xf]
  %v1038 = vld [vmem:[%s5 + $0x34] sm:$0xf]
  %v1039 = vld [vmem:[%s5 + $0x38] sm:$0xf]
  %v1040 = vld [vmem:[%s5 + $0x3c] sm:$0xf]
  %v1041 = vld [vmem:[%s5 + $0x40] sm:$0xf]
  %v1042 = vld [vmem:[%s5 + $0x44] sm:$0xf]
  %v1043 = vld [vmem:[%s5 + $0x48] sm:$0xf]
  %v1044 = vld [vmem:[%s5 + $0x4c] sm:$0xf]
  %v1045 = vld [vmem:[%s5 + $0x50] sm:$0xf]
  %v1046 = vld [vmem:[%s5 + $0x54] sm:$0xf]
  %v1047 = vld [vmem:[%s5 + $0x58] sm:$0xf]
  %v1048 = vld [vmem:[%s5 + $0x5c] sm:$0xf]
  %v1049 = vld [vmem:[%s5 + $0x60] sm:$0xf]
  %v1050 = vld [vmem:[%s5 + $0x64] sm:$0xf]
  %v1051 = vld [vmem:[%s5 + $0x68] sm:$0xf]
  %v1052 = vld [vmem:[%s5 + $0x6c] sm:$0xf]
  %v1053 = vld [vmem:[%s5 + $0x70] sm:$0xf]
  %v1054 = vld [vmem:[%s5 + $0x74] sm:$0xf]
  %v1055 = vld [vmem:[%s5 + $0x78] sm:$0xf]
  %v1056 = vld [vmem:[%s5 + $0x7c] sm:$0xf]
  %v1057 = vld [vmem:[%s5 + $0x80] sm:$0xf]
  %v1058 = vld [vmem:[%s5 + $0x84] sm:$0xf]
  %v1059 = vld [vmem:[%s5 + $0x88] sm:$0xf]
  %v1060 = vld [vmem:[%s5 + $0x8c] sm:$0xf]
  %v1061 = vld [vmem:[%s5 + $0x90] sm:$0xf]
  %v1062 = vld [vmem:[%s5 + $0x94] sm:$0xf]
  %v1063 = vld [vmem:[%s5 + $0x98] sm:$0xf]
  %v1064 = vld [vmem:[%s5 + $0x9c] sm:$0xf]
  %v1065 = vld [vmem:[%s5 + $0xa0] sm:$0xf]
  %v1066 = vld [vmem:[%s5 + $0xa4] sm:$0xf]
  %v1067 = vld [vmem:[%s5 + $0xa8] sm:$0xf]
  %v1068 = vld [vmem:[%s5 + $0xac] sm:$0xf]
  %v1069 = vld [vmem:[%s5 + $0xb0] sm:$0xf]
  %v1070 = vld [vmem:[%s5 + $0xb4] sm:$0xf]
  %v1071 = vld [vmem:[%s5 + $0xb8] sm:$0xf]
  %v1072 = vld [vmem:[%s5 + $0xbc] sm:$0xf]
  %v1073 = vld [vmem:[%s6] sm:$0x1]
  %v1075 = vlaneseq
  %v1076 = vshrl.u32 %v1075, 7
  %v1077 = vsub.s32 0, %v1076
  %v1078 = vrot.slane %v1073, %v1077
  %v1128 = vunpack.c.l.b16 %v1025
  %v1129 = vunpack.c.l.b16 %v1026
  %v1130 = vunpack.c.l.b16 %v1027
  %v1131 = vunpack.c.l.b16 %v1028
  %v1132 = vunpack.c.l.b16 %v1029
  %v1133 = vunpack.c.l.b16 %v1030
  %v1134 = vunpack.c.l.b16 %v1031
  %v1135 = vunpack.c.l.b16 %v1032
  %v1136 = vunpack.c.l.b16 %v1033
  %v1137 = vunpack.c.l.b16 %v1034
  %v1138 = vunpack.c.l.b16 %v1035
  %v1139 = vunpack.c.l.b16 %v1036
  %v1140 = vunpack.c.l.b16 %v1037
  %v1141 = vunpack.c.l.b16 %v1038
  %v1142 = vunpack.c.l.b16 %v1039
  %v1143 = vunpack.c.l.b16 %v1040
  %v1144 = vunpack.c.l.b16 %v1041
  %v1145 = vunpack.c.l.b16 %v1042
  %v1146 = vunpack.c.l.b16 %v1043
  %v1147 = vunpack.c.l.b16 %v1044
  %v1148 = vunpack.c.l.b16 %v1045
  %v1149 = vunpack.c.l.b16 %v1046
  %v1150 = vunpack.c.l.b16 %v1047
  %v1151 = vunpack.c.l.b16 %v1048
  %v1152 = vunpack.c.l.b16 %v1049
  %v1153 = vunpack.c.l.b16 %v1050
  %v1154 = vunpack.c.l.b16 %v1051
  %v1155 = vunpack.c.l.b16 %v1052
  %v1156 = vunpack.c.l.b16 %v1053
  %v1157 = vunpack.c.l.b16 %v1054
  %v1158 = vunpack.c.l.b16 %v1055
  %v1159 = vunpack.c.l.b16 %v1056
  %v1160 = vunpack.c.l.b16 %v1057
  %v1161 = vunpack.c.l.b16 %v1058
  %v1162 = vunpack.c.l.b16 %v1059
  %v1163 = vunpack.c.l.b16 %v1060
  %v1164 = vunpack.c.l.b16 %v1061
  %v1165 = vunpack.c.l.b16 %v1062
  %v1166 = vunpack.c.l.b16 %v1063
  %v1167 = vunpack.c.l.b16 %v1064
  %v1168 = vunpack.c.l.b16 %v1065
  %v1169 = vunpack.c.l.b16 %v1066
  %v1170 = vunpack.c.l.b16 %v1067
  %v1171 = vunpack.c.l.b16 %v1068
  %v1172 = vunpack.c.l.b16 %v1069
  %v1173 = vunpack.c.l.b16 %v1070
  %v1174 = vunpack.c.l.b16 %v1071
  %v1175 = vunpack.c.l.b16 %v1072
  %v1176 = vpack.c.b16 %v1129, %v1128
  %v1177 = vpack.c.b16 %v1131, %v1130
  %v1178 = vpack.c.b16 %v1133, %v1132
  %v1179 = vpack.c.b16 %v1135, %v1134
  %v1180 = vpack.c.b16 %v1137, %v1136
  %v1181 = vpack.c.b16 %v1139, %v1138
  %v1182 = vpack.c.b16 %v1141, %v1140
  %v1183 = vpack.c.b16 %v1143, %v1142
  %v1184 = vpack.c.b16 %v1145, %v1144
  %v1185 = vpack.c.b16 %v1147, %v1146
  %v1186 = vpack.c.b16 %v1149, %v1148
  %v1187 = vpack.c.b16 %v1151, %v1150
  %v1188 = vpack.c.b16 %v1153, %v1152
  %v1189 = vpack.c.b16 %v1155, %v1154
  %v1190 = vpack.c.b16 %v1157, %v1156
  %v1191 = vpack.c.b16 %v1159, %v1158
  %v1192 = vpack.c.b16 %v1161, %v1160
  %v1193 = vpack.c.b16 %v1163, %v1162
  %v1194 = vpack.c.b16 %v1165, %v1164
  %v1195 = vpack.c.b16 %v1167, %v1166
  %v1196 = vpack.c.b16 %v1169, %v1168
  %v1197 = vpack.c.b16 %v1171, %v1170
  %v1198 = vpack.c.b16 %v1173, %v1172
  %v1199 = vpack.c.b16 %v1175, %v1174
  %1224 = vmatprep.subr.bf16.mxu0 0
  %1225 = vmatpush1.bf16.msra.mxu0 %v1176
  %1226 = vmatprep.subr.bf16.mxu0 0
  %1227 = vmatpush1.bf16.msra.mxu0 %v1177
  %1228 = vmatprep.subr.bf16.mxu0 0
  %1229 = vmatpush1.bf16.msra.mxu0 %v1178
  %1230 = vmatprep.subr.bf16.mxu0 0
  %1231 = vmatpush1.bf16.msra.mxu0 %v1179
  %1232 = vmatprep.subr.bf16.mxu0 0
  %1233 = vmatpush1.bf16.msra.mxu0 %v1180
  %1234 = vmatprep.subr.bf16.mxu0 0
  %1235 = vmatpush1.bf16.msra.mxu0 %v1181
  %1236 = vmatprep.subr.bf16.mxu0 0
  %1237 = vmatpush1.bf16.msra.mxu0 %v1182
  %1238 = vmatprep.subr.bf16.mxu0 0
  %1239 = vmatpush1.bf16.msra.mxu0 %v1183
  %1240 = vmatprep.subr.bf16.mxu0 0
  %1241 = vmatpush1.bf16.msra.mxu0 %v1184
  %1242 = vmatprep.subr.bf16.mxu0 0
  %1243 = vmatpush1.bf16.msra.mxu0 %v1185
  %1244 = vmatprep.subr.bf16.mxu0 0
  %1245 = vmatpush1.bf16.msra.mxu0 %v1186
  %1246 = vmatprep.subr.bf16.mxu0 0
  %1247 = vmatpush1.bf16.msra.mxu0 %v1187
  %1248 = vmatprep.subr.bf16.mxu0 0
  %1249 = vmatpush1.bf16.msra.mxu0 %v1188
  %1250 = vmatprep.subr.bf16.mxu0 0
  %1251 = vmatpush1.bf16.msra.mxu0 %v1189
  %1252 = vmatprep.subr.bf16.mxu0 0
  %1253 = vmatpush1.bf16.msra.mxu0 %v1190
  %1254 = vmatprep.subr.bf16.mxu0 0
  %1255 = vmatpush1.bf16.msra.mxu0 %v1191
  %1256 = vmatprep.mubr.bf16.mxu0 %v1023
  %1257 = vmatmul.mubr.bf16.gmra.mrb[0].mxu0 %v1022
  %v1258 = vpop.f32.mrb[0].mxu0
  %v1259 = vadd.f32 %v1078, %v1258
  %v1260 = vpop.f32.mrb[0].mxu0
  %v1261 = vpop.f32.mrb[0].mxu0
  %v1262 = vpop.f32.mrb[0].mxu0
  %1263 = vdwg.mxu0
  %1264 = vmatprep.subr.bf16.mxu0 0
  %1265 = vmatpush1.bf16.msra.mxu0 %v1192
  %1266 = vmatprep.subr.bf16.mxu0 0
  %1267 = vmatpush1.bf16.msra.mxu0 %v1193
  %1268 = vmatprep.subr.bf16.mxu0 0
  %1269 = vmatpush1.bf16.msra.mxu0 %v1194
  %1270 = vmatprep.subr.bf16.mxu0 0
  %1271 = vmatpush1.bf16.msra.mxu0 %v1195
  %1272 = vmatprep.subr.bf16.mxu0 0
  %1273 = vmatpush1.bf16.msra.mxu0 %v1196
  %1274 = vmatprep.subr.bf16.mxu0 0
  %1275 = vmatpush1.bf16.msra.mxu0 %v1197
  %1276 = vmatprep.subr.bf16.mxu0 0
  %1277 = vmatpush1.bf16.msra.mxu0 %v1198
  %1278 = vmatprep.subr.bf16.mxu0 0
  %1279 = vmatpush1.bf16.msra.mxu0 %v1199
  %1280 = vmatprep.subr.bf16.mxu0 0
  %1281 = vmatpush1.bf16.msra.mxu0 0
  %1282 = vmatprep.subr.bf16.mxu0 0
  %1283 = vmatpush1.bf16.msra.mxu0 0
  %1284 = vmatprep.subr.bf16.mxu0 0
  %1285 = vmatpush1.bf16.msra.mxu0 0
  %1286 = vmatprep.subr.bf16.mxu0 0
  %1287 = vmatpush1.bf16.msra.mxu0 0
  %1288 = vmatprep.subr.bf16.mxu0 0
  %1289 = vmatpush1.bf16.msra.mxu0 0
  %1290 = vmatprep.subr.bf16.mxu0 0
  %1291 = vmatpush1.bf16.msra.mxu0 0
  %1292 = vmatprep.subr.bf16.mxu0 0
  %1293 = vmatpush1.bf16.msra.mxu0 0
  %1294 = vmatprep.subr.bf16.mxu0 0
  %1295 = vmatpush1.bf16.msra.mxu0 0
  %1296 = vmatprep.mubr.bf16.mxu0 0
  %1297 = vmatmul.mubr.bf16.gmra.mrb[0].mxu0 %v1024
  %v1298 = vpop.f32.mrb[0].mxu0
  %v1299 = vadd.f32 %v1259, %v1298
  %v1300 = vpop.f32.mrb[0].mxu0
  %v1301 = vpop.f32.mrb[0].mxu0
  %v1302 = vpop.f32.mrb[0].mxu0
  %1303 = vdwg.mxu0
  %v1304 = vld [vmem:[%s7] sm:$0x1]
  %v1305 = vtanh.pop %v1299
  %v1307 = vlaneseq
  %v1308 = vshrl.u32 %v1307, 7
  %v1309 = vsub.s32 0, %v1308
  %v1310 = vrot.slane %v1304, %v1309
  %v1312 = vmul.f32 %v1310, %v1305
  %1313 = vst [vmem:[%s9] sm:$0xff] %v1312
  %v1314 = vld [vmem:[%s8] sm:$0x1]
  %v1315 = vadd.f32 %v1312, %v33
  %v1316 = vsub.f32 0.0, %v1314
  %v1318 = vlaneseq
  %v1319 = vshrl.u32 %v1318, 7
  %v1320 = vsub.s32 0, %v1319
  %v1321 = vrot.slane %v1316, %v1320
  %v1323 = vmax.f32 %v1321, %v1315
  %v1325 = vlaneseq
  %v1326 = vshrl.u32 %v1325, 7
  %v1327 = vsub.s32 0, %v1326
  %v1328 = vrot.slane %v1314, %v1327
  %v1330 = vmin.f32 %v1328, %v1323
  %vm1331 = vcmask 48128
  %1332 = vst.msk [vmem:[%s9] sm:$0xff] %vm1331, %v1330
  // Predicated region
  $region38: #{actor_forward.1} parent=0 // pred_check
    _
  $region39: #{actor_forward.1} parent=0 // pred_check_branch
    %1334 = sbr.rel (0) target = $region41
  $region40: #{actor_forward.1} parent=0 // pred_region
    _
  $region41: #{actor_forward.1} parent=0 // pred_fallthru
    _
  // Predicated region
  $region42: #{actor_forward.1} parent=0 // pred_check
    _
  $region43: #{actor_forward.1} parent=0 // pred_check_branch
    %1336 = sbr.rel (0) target = $region45
  $region44: #{actor_forward.1} parent=0 // pred_region
    _
  $region45: #{actor_forward.1} parent=0 // pred_fallthru
    _

</llo_original>
